<compile_context>
chip_gen: v7x
topology: tpu7x:2x2x1
jax: 0.10.0
libtpu: 0.0.40
codegen_flags: <defaults>
</compile_context>

<pallas_src>
import math
from functools import partial

import jax
import jax.numpy as jnp
from jax import lax
from jax.experimental import pallas as pl
from jax.experimental.pallas import tpu as pltpu


def _round_up(x, m):
    return ((x + m - 1) // m) * m


def _vmem_limit_bytes():
    """Per-generation VMEM budget with headroom for compiler scratch:
    128-MiB parts (v5e/v6e) -> 112 MiB, 64-MiB parts (v7x) -> 48 MiB."""
    cap = None
    try:
        cap = getattr(pltpu.get_tpu_info(), "vmem_capacity_bytes", None)
    except Exception:
        cap = None
    if not cap:
        cap = 64 * 1024 * 1024          # conservative default (v7x physical)
    return int(min(cap - 16 * 1024 * 1024, 112 * 1024 * 1024))


def _pick_cov_tile(b_pad, cap):
    """Largest 128-multiple tile <= cap that divides b_pad (or b_pad itself)."""
    cap = max(128, cap)
    if b_pad <= cap:
        return b_pad
    t = (cap // 128) * 128
    while t > 128 and b_pad % t:
        t -= 128
    return t if (t >= 128 and b_pad % t == 0) else b_pad


# ---------------------------------------------------------------------------
# Kernel 1: random features + fused [tmp | logits] matmul.
#   phi   = cos(x @ (input_scale*W) + b) * feature_scale
#   fused = phi @ [ridge*Cov | W_out^T] + [0 | out_bias]
# 1-D grid over batch tiles; weights are VMEM-resident (constant index maps,
# single-buffered), so one MXU weight push serves both the head and Phi@Cov.
# ---------------------------------------------------------------------------
def _feature_kernel(feature_scale, x_ref, w_ref, b_ref, rhs_ref, bias_ref,
                    phi_ref, fused_ref):
    z = jnp.dot(x_ref[...], w_ref[...],
                preferred_element_type=jnp.float32) + b_ref[...]
    phi = jnp.cos(z) * feature_scale                       # f32 (EUP/VPU)
    phi_ref[...] = phi

    out = jnp.dot(phi.astype(rhs_ref.dtype), rhs_ref[...],
                  preferred_element_type=jnp.float32) + bias_ref[...]
    fused_ref[...] = out                                   # [tmp | logits], f32


# ---------------------------------------------------------------------------
# Kernel 2: covariance  covar = tmp @ phi^T  (dot_general contracts the last
# axes directly on the MXU, no explicit transpose). Shared by both the
# "phi resident" row-block mode and the fully tiled (i, j) mode.
# ---------------------------------------------------------------------------
def _cov_kernel(matmul_dtype, tmp_ref, phi_ref, covar_ref):
    covar_ref[...] = lax.dot_general(
        tmp_ref[...].astype(matmul_dtype), phi_ref[...].astype(matmul_dtype),
        dimension_numbers=(((1,), (1,)), ((), ())),
        preferred_element_type=jnp.float32)


# ---------------------------------------------------------------------------
# Parameter preparation (call ONCE when parameters/covariance change, not per
# forward): fold input_scale into W and ridge_penalty into Cov, pre-transpose
# the output weight, pad the feature/output dims to lane-dense widths, and
# concatenate [ridge*Cov | W_out^T] into a single fused RHS.
# bf16 matmul_dtype is profitable on every generation (v5e/v6e/v7x MXUs are
# bf16-native); accumulation stays f32.
# ---------------------------------------------------------------------------
def prepare_rfgp_params(w_rf, b_rf, w_out, out_bias, covariance, *,
                        input_scale, ridge_penalty,
                        matmul_dtype=jnp.float32):
    D, H = w_rf.shape
    O = w_out.shape[0]                           # torch nn.Linear weight is (O, H)
    H_pad = max(128, _round_up(H, 128))
    O_pad = max(128, _round_up(O, 128))

    w = jnp.zeros((D, H_pad), matmul_dtype).at[:, :H].set(
        (w_rf * input_scale).astype(matmul_dtype))               # fold input_scale
    b = jnp.zeros((1, H_pad), jnp.float32).at[:, :H].set(
        b_rf.reshape(1, H).astype(jnp.float32))

    rhs = jnp.zeros((H_pad, H_pad + O_pad), matmul_dtype)
    rhs = rhs.at[:H, :H].set((ridge_penalty * covariance).astype(matmul_dtype))
    rhs = rhs.at[:H, H_pad:H_pad + O].set(
        jnp.transpose(w_out).astype(matmul_dtype))
    bias = jnp.zeros((1, H_pad + O_pad), jnp.float32).at[:, H_pad:H_pad + O].set(
        out_bias.reshape(1, O).astype(jnp.float32))

    return dict(w=w, b=b, rhs=rhs, bias=bias,
                n_feat=H, n_out=O, h_pad=H_pad, o_pad=O_pad)


# ---------------------------------------------------------------------------
# Forward wrapper: returns (logits, covariance, random_features) — the
# eval-mode forward with return_covariance / return_random_features.
# ---------------------------------------------------------------------------
def rfgp_forward(x, params, *, feature_scale, block_b=256, cov_block=512,
                 cov_phi_resident=None):
    B, D = x.shape
    H = params["n_feat"]
    n_out = params["n_out"]
    H_pad = params["h_pad"]
    O_pad = params["o_pad"]
    matmul_dtype = params["w"].dtype
    dt_size = jnp.dtype(matmul_dtype).itemsize

    vmem_limit = _vmem_limit_bytes()
    budget = int(vmem_limit * 0.8)

    # ---- pass-1 batch tiling ------------------------------------------------
    if B <= block_b:
        tb = _round_up(B, 8)
    else:
        tb = _round_up(block_b, 128)    # >=256 by default: fills the 256-wide MXU

    const_bytes = ((D * H_pad + H_pad * (H_pad + O_pad)) * dt_size
                   + (2 * H_pad + O_pad) * 4)               # single-buffered weights

    def _p1_tile_bytes(t):
        return 2 * (t * D * dt_size + t * H_pad * 4 + t * (H_pad + O_pad) * 4)

    while tb > 128 and const_bytes + _p1_tile_bytes(tb) > budget:
        tb //= 2
    # TODO(synk): for very large feature counts (H_pad >= ~2500 in f32 on 64-MiB
    # VMEM parts) the fused RHS no longer fits; add a column-strip grid axis over rhs.

    B_pad = _round_up(B, tb)
    x = x.astype(matmul_dtype)          # pre-cast once (halves x DMA on bf16 path)
    if B_pad != B:
        x = jnp.pad(x, ((0, B_pad - B), (0, 0)))
    nb = B_pad // tb

    def const_spec(shape):              # VMEM-resident weights, single-buffered
        return pl.BlockSpec(shape, lambda i: (0, 0), pipeline_mode=pl.Buffered(1))

    phi, fused = pl.pallas_call(
        partial(_feature_kernel, feature_scale),
        grid=(nb,),
        in_specs=[
            pl.BlockSpec((tb, D), lambda i: (i, 0)),             # x tile (pipelined)
            const_spec((D, H_pad)),                              # input_scale * W
            const_spec((1, H_pad)),                              # RF bias
            const_spec((H_pad, H_pad + O_pad)),                  # [ridge*Cov | W_out^T]
            const_spec((1, H_pad + O_pad)),                      # [0 | output bias]
        ],
        out_specs=(
            pl.BlockSpec((tb, H_pad), lambda i: (i, 0)),         # Phi (f32)
            pl.BlockSpec((tb, H_pad + O_pad), lambda i: (i, 0)), # [tmp | logits] (f32)
        ),
        out_shape=(
            jax.ShapeDtypeStruct((B_pad, H_pad), jnp.float32),
            jax.ShapeDtypeStruct((B_pad, H_pad + O_pad), jnp.float32),
        ),
        compiler_params=pltpu.CompilerParams(
            dimension_semantics=("parallel",),
            vmem_limit_bytes=vmem_limit),
    )(x, params["w"], params["b"], params["rhs"], params["bias"])

    # ---- pass-2 covariance ---------------------------------------------------
    # tmp = Phi @ (ridge*Cov) lives in the first H_pad columns of `fused`, so the
    # cov kernel reads it straight from the fused output (no host-side slice).
    phi_bytes = B_pad * H_pad * 4
    if cov_phi_resident is None:
        cov_phi_resident = (phi_bytes + 2 * 128 * H_pad * 4
                            + 2 * 128 * B_pad * 4) <= budget

    # TODO(synk): covar is symmetric (Cov is SPD); an upper-triangular grid via a
    # scalar-prefetched (i, j) tile list + mirrored writeback would halve pass-2
    # FLOPs / HBM writes for large B.
    if cov_phi_resident:
        # Phi fully VMEM-resident (single-buffered); one lane-dense (tb2, B_pad)
        # row block per grid step -> Phi is read from HBM exactly once.
        tb2 = _pick_cov_tile(B_pad, cov_block)
        while tb2 > 128 and (phi_bytes + 2 * tb2 * H_pad * 4
                             + 2 * tb2 * B_pad * 4) > budget:
            tb2 = max(128, tb2 // 2)
        if B_pad % tb2:
            tb2 = 128 if B_pad % 128 == 0 else B_pad
        covar = pl.pallas_call(
            partial(_cov_kernel, matmul_dtype),
            grid=(B_pad // tb2,),
            in_specs=[
                pl.BlockSpec((tb2, H_pad), lambda i: (i, 0)),        # tmp row tile
                pl.BlockSpec((B_pad, H_pad), lambda i: (0, 0),
                             pipeline_mode=pl.Buffered(1)),          # Phi, resident
            ],
            out_specs=pl.BlockSpec((tb2, B_pad), lambda i: (i, 0)),
            out_shape=jax.ShapeDtypeStruct((B_pad, B_pad), jnp.float32),
            compiler_params=pltpu.CompilerParams(
                dimension_semantics=("parallel",),
                vmem_limit_bytes=vmem_limit),
        )(fused, phi)
    else:
        # Fallback: fully tiled (i, j) grid when Phi does not fit in VMEM.
        tb2 = _pick_cov_tile(B_pad, cov_block)
        while tb2 > 128 and (4 * tb2 * H_pad * 4 + 2 * tb2 * tb2 * 4) > budget:
            tb2 = max(128, tb2 // 2)
        if B_pad % tb2 or (tb2 % 128 and tb2 != B_pad):
            tb2 = 128 if B_pad % 128 == 0 else B_pad
        nb2 = B_pad // tb2
        covar = pl.pallas_call(
            partial(_cov_kernel, matmul_dtype),
            grid=(nb2, nb2),
            in_specs=[
                pl.BlockSpec((tb2, H_pad), lambda i, j: (i, 0)),     # tmp i-tile
                pl.BlockSpec((tb2, H_pad), lambda i, j: (j, 0)),     # Phi j-tile
            ],
            out_specs=pl.BlockSpec((tb2, tb2), lambda i, j: (i, j)),
            out_shape=jax.ShapeDtypeStruct((B_pad, B_pad), jnp.float32),
            compiler_params=pltpu.CompilerParams(
                dimension_semantics=("parallel", "parallel"),
                vmem_limit_bytes=vmem_limit),
        )(fused, phi)

    # Trailing trims are cheap host-side slices; callers able to consume padded
    # shapes can skip them by reading `fused` / `covar` / `phi` directly.
    logits = fused[:B, H_pad:H_pad + n_out]
    return logits, covar[:B, :B], phi[:B, :H]


# ---------------------------------------------------------------------------
# Pure-JAX reference of the same forward (eval mode).
# ---------------------------------------------------------------------------
def reference_forward(x, w_rf, b_rf, w_out, out_bias, cov_train, *,
                      input_scale, feature_scale, ridge_penalty):
    phi = jnp.cos((x * input_scale) @ w_rf + b_rf) * feature_scale
    logits = phi @ w_out.T + out_bias
    covar = ridge_penalty * phi @ cov_train @ phi.T
    return logits, covar, phi


if __name__ == "__main__":
    # ----- module hyper-parameters (mirrors RandomFeatureGaussianProcess) -----
    B, D_IN, H, D_OUT = 8, 16, 128, 8
    kernel_scale = 1.0
    ridge_penalty = 1.0
    init_output_bias = 0.0
    input_scale = 1.0 / math.sqrt(kernel_scale)
    feature_scale = math.sqrt(2.0 / float(H))

    key = jax.random.PRNGKey(0)
    kx, kw, kb, ko, kc = jax.random.split(key, 5)
    x = jax.random.normal(kx, (B, D_IN), dtype=jnp.float32)
    w_rf = jax.random.normal(kw, (D_IN, H), dtype=jnp.float32)        # RF weight
    b_rf = jax.random.uniform(kb, (H,), dtype=jnp.float32,
                              minval=0.0, maxval=2.0 * math.pi)        # RF bias
    w_out = jax.random.normal(ko, (D_OUT, H), dtype=jnp.float32) / math.sqrt(H)
    out_bias = jnp.ones((D_OUT,), dtype=jnp.float32) * init_output_bias

    # LaplaceRandomFeatureCovariance eval path: Cov_train = inv(precision).
    # TODO(synk): training-mode precision moving-average update is stateful buffer
    # bookkeeping (and the inverse itself is cached host-side), not kernel compute.
    a = jax.random.normal(kc, (H, H), dtype=jnp.float32)
    precision = a @ a.T / H + ridge_penalty * jnp.eye(H, dtype=jnp.float32)
    cov_train = jnp.linalg.inv(precision)

    # ---------------- test 1: f32, single tile, Phi-resident cov pass --------
    params = prepare_rfgp_params(
        w_rf, b_rf, w_out, out_bias, cov_train,
        input_scale=input_scale, ridge_penalty=ridge_penalty)
    logits, covar, phi = rfgp_forward(x, params, feature_scale=feature_scale)
    jax.block_until_ready((logits, covar, phi))

    logits_r, covar_r, phi_r = reference_forward(
        x, w_rf, b_rf, w_out, out_bias, cov_train,
        input_scale=input_scale, feature_scale=feature_scale,
        ridge_penalty=ridge_penalty)
    assert jnp.allclose(phi, phi_r, atol=1e-4, rtol=1e-4)
    assert jnp.allclose(logits, logits_r, atol=1e-4, rtol=1e-4)
    assert jnp.allclose(covar, covar_r, atol=1e-4, rtol=1e-4)

    # ---------------- test 2: multi-tile batch, both pass-2 modes ------------
    B2, D2, H2, O2 = 272, 32, 256, 10
    fs2 = math.sqrt(2.0 / float(H2))
    k1, k2, k3, k4 = jax.random.split(jax.random.PRNGKey(1), 4)
    x2 = jax.random.normal(k1, (B2, D2), dtype=jnp.float32)
    w2 = jax.random.normal(k2, (D2, H2), dtype=jnp.float32)
    b2 = jax.random.uniform(k3, (H2,), dtype=jnp.float32,
                            minval=0.0, maxval=2.0 * math.pi)
    wo2 = jax.random.normal(k4, (O2, H2), dtype=jnp.float32) / math.sqrt(H2)
    ob2 = jnp.zeros((O2,), dtype=jnp.float32)
    cov2 = jnp.linalg.inv(ridge_penalty * jnp.eye(H2, dtype=jnp.float32))

    params2 = prepare_rfgp_params(
        w2, b2, wo2, ob2, cov2,
        input_scale=input_scale, ridge_penalty=ridge_penalty)
    l2r, c2r, p2r = reference_forward(
        x2, w2, b2, wo2, ob2, cov2,
        input_scale=input_scale, feature_scale=fs2, ridge_penalty=ridge_penalty)

    # (a) Phi-resident row-block covariance pass (default / auto)
    l2a, c2a, p2a = rfgp_forward(x2, params2, feature_scale=fs2,
                                 block_b=128, cov_block=128)
    jax.block_until_ready((l2a, c2a, p2a))
    assert jnp.allclose(p2a, p2r, atol=1e-3, rtol=1e-3)
    assert jnp.allclose(l2a, l2r, atol=1e-3, rtol=1e-3)
    assert jnp.allclose(c2a, c2r, atol=1e-3, rtol=1e-3)

    # (b) fully tiled (i, j) covariance pass (VMEM fallback path)
    l2b, c2b, p2b = rfgp_forward(x2, params2, feature_scale=fs2,
                                 block_b=128, cov_block=128,
                                 cov_phi_resident=False)
    jax.block_until_ready((l2b, c2b, p2b))
    assert jnp.allclose(p2b, p2r, atol=1e-3, rtol=1e-3)
    assert jnp.allclose(l2b, l2r, atol=1e-3, rtol=1e-3)
    assert jnp.allclose(c2b, c2r, atol=1e-3, rtol=1e-3)

    # ---------------- test 3: bf16-MXU path (all generations), loose tol ------
    params_bf16 = prepare_rfgp_params(
        w_rf, b_rf, w_out, out_bias, cov_train,
        input_scale=input_scale, ridge_penalty=ridge_penalty,
        matmul_dtype=jnp.bfloat16)
    l3, c3, p3 = rfgp_forward(x, params_bf16, feature_scale=feature_scale)
    jax.block_until_ready((l3, c3, p3))
    assert jnp.allclose(p3, phi_r, atol=0.15, rtol=0.15)
    assert jnp.allclose(l3, logits_r, atol=0.15, rtol=0.15)
    assert jnp.allclose(c3, covar_r, atol=0.15, rtol=0.15)

    print("KERNEL_OK")
</pallas_src>

<mosaic_0001>
module attributes {stable_mosaic.version = 11 : i64} {
  func.func @_feature_kernel(%arg0: i32, %arg1: memref<8x16xf32, #tpu.memory_space<vmem>>, %arg2: memref<16x128xf32, #tpu.memory_space<vmem>>, %arg3: memref<1x128xf32, #tpu.memory_space<vmem>>, %arg4: memref<128x256xf32, #tpu.memory_space<vmem>>, %arg5: memref<1x256xf32, #tpu.memory_space<vmem>>, %arg6: memref<8x128xf32, #tpu.memory_space<vmem>>, %arg7: memref<8x256xf32, #tpu.memory_space<vmem>>) attributes {dimension_semantics = [#tpu.dimension_semantics<parallel>], iteration_bounds = array<i64: 1>, scalar_prefetch = 0 : i64, scratch_operands = 0 : i64, tpu.core_type = #tpu.core_type<tc>, window_params = [{transform_indices = @transform_0, window_bounds = array<i64: 8, 16>}, {pipeline_mode = #tpu.pipeline_mode<synchronous>, transform_indices = @transform_1, window_bounds = array<i64: 16, 128>}, {pipeline_mode = #tpu.pipeline_mode<synchronous>, transform_indices = @transform_2, window_bounds = array<i64: 1, 128>}, {pipeline_mode = #tpu.pipeline_mode<synchronous>, transform_indices = @transform_3, window_bounds = array<i64: 128, 256>}, {pipeline_mode = #tpu.pipeline_mode<synchronous>, transform_indices = @transform_4, window_bounds = array<i64: 1, 256>}, {transform_indices = @transform_5, window_bounds = array<i64: 8, 128>}, {transform_indices = @transform_6, window_bounds = array<i64: 8, 256>}]} {
    %c0 = arith.constant 0 : index
    %c0_0 = arith.constant 0 : index
    %0 = vector.load %arg1[%c0, %c0_0] : memref<8x16xf32, #tpu.memory_space<vmem>>, vector<8x16xf32>
    %c0_1 = arith.constant 0 : index
    %c0_2 = arith.constant 0 : index
    %1 = vector.load %arg2[%c0_1, %c0_2] : memref<16x128xf32, #tpu.memory_space<vmem>>, vector<16x128xf32>
    %cst = arith.constant dense<0.000000e+00> : vector<8x128xf32>
    %2 = tpu.matmul %0, %1, %cst {dimension_numbers = #tpu.dot_dimension_numbers<[1], [0], [0], [1], [0, 0, 1, 1], [], []>} : vector<8x16xf32>, vector<16x128xf32>, vector<8x128xf32> -> vector<8x128xf32>
    %c0_3 = arith.constant 0 : index
    %c0_4 = arith.constant 0 : index
    %3 = vector.load %arg3[%c0_3, %c0_4] : memref<1x128xf32, #tpu.memory_space<vmem>>, vector<1x128xf32>
    %4 = vector.broadcast %3 : vector<1x128xf32> to vector<8x128xf32>
    %5 = arith.addf %2, %4 : vector<8x128xf32>
    %6 = math.cos %5 : vector<8x128xf32>
    %cst_5 = arith.constant 1.250000e-01 : f32
    %7 = vector.broadcast %cst_5 : f32 to vector<8x128xf32>
    %8 = arith.mulf %6, %7 : vector<8x128xf32>
    %c0_6 = arith.constant 0 : index
    %c0_7 = arith.constant 0 : index
    %9 = vector.load %arg6[%c0_6, %c0_7] : memref<8x128xf32, #tpu.memory_space<vmem>>, vector<8x128xf32>
    tpu.vector_store %arg6[%c0_6, %c0_7], %8 {strides = array<i32>} : memref<8x128xf32, #tpu.memory_space<vmem>>, vector<8x128xf32>,
    %c0_8 = arith.constant 0 : index
    %c0_9 = arith.constant 0 : index
    %10 = vector.load %arg4[%c0_8, %c0_9] : memref<128x256xf32, #tpu.memory_space<vmem>>, vector<128x256xf32>
    %cst_10 = arith.constant dense<0.000000e+00> : vector<8x256xf32>
    %11 = tpu.matmul %8, %10, %cst_10 {dimension_numbers = #tpu.dot_dimension_numbers<[1], [0], [0], [1], [0, 0, 1, 1], [], []>} : vector<8x128xf32>, vector<128x256xf32>, vector<8x256xf32> -> vector<8x256xf32>
    %c0_11 = arith.constant 0 : index
    %c0_12 = arith.constant 0 : index
    %12 = vector.load %arg5[%c0_11, %c0_12] : memref<1x256xf32, #tpu.memory_space<vmem>>, vector<1x256xf32>
    %13 = vector.broadcast %12 : vector<1x256xf32> to vector<8x256xf32>
    %14 = arith.addf %11, %13 : vector<8x256xf32>
    %c0_13 = arith.constant 0 : index
    %c0_14 = arith.constant 0 : index
    %15 = vector.load %arg7[%c0_13, %c0_14] : memref<8x256xf32, #tpu.memory_space<vmem>>, vector<8x256xf32>
    tpu.vector_store %arg7[%c0_13, %c0_14], %14 {strides = array<i32>} : memref<8x256xf32, #tpu.memory_space<vmem>>, vector<8x256xf32>,
    return
  }
  func.func @transform_0(%arg0: i32) -> (i32, i32) {
    %c0_i32 = arith.constant 0 : i32
    %c0_i32_0 = arith.constant 0 : i32
    return %arg0, %c0_i32 : i32, i32
  }
  func.func @transform_1(%arg0: i32) -> (i32, i32) {
    %c0_i32 = arith.constant 0 : i32
    %c0_i32_0 = arith.constant 0 : i32
    %c0_i32_1 = arith.constant 0 : i32
    return %c0_i32, %c0_i32_0 : i32, i32
  }
  func.func @transform_2(%arg0: i32) -> (i32, i32) {
    %c0_i32 = arith.constant 0 : i32
    %c0_i32_0 = arith.constant 0 : i32
    %c0_i32_1 = arith.constant 0 : i32
    return %c0_i32, %c0_i32_0 : i32, i32
  }
  func.func @transform_3(%arg0: i32) -> (i32, i32) {
    %c0_i32 = arith.constant 0 : i32
    %c0_i32_0 = arith.constant 0 : i32
    %c0_i32_1 = arith.constant 0 : i32
    return %c0_i32, %c0_i32_0 : i32, i32
  }
  func.func @transform_4(%arg0: i32) -> (i32, i32) {
    %c0_i32 = arith.constant 0 : i32
    %c0_i32_0 = arith.constant 0 : i32
    %c0_i32_1 = arith.constant 0 : i32
    return %c0_i32, %c0_i32_0 : i32, i32
  }
  func.func @transform_5(%arg0: i32) -> (i32, i32) {
    %c0_i32 = arith.constant 0 : i32
    %c0_i32_0 = arith.constant 0 : i32
    return %arg0, %c0_i32 : i32, i32
  }
  func.func @transform_6(%arg0: i32) -> (i32, i32) {
    %c0_i32 = arith.constant 0 : i32
    %c0_i32_0 = arith.constant 0 : i32
    return %arg0, %c0_i32 : i32, i32
  }
}

</mosaic_0001>

<llo_original>
// kernel: tpu_custom_call.1
$region0: #{tpu_custom_call.1}
  #allocation0 [shape = 'u32[]', space=smem, size = 0x4, offset = 0x4, fixed_abs, tag = 'smem constant byte address 0x4 - core index']
  #allocation1 [shape = 'u32[144,128]{1,0:T(1,128)}', space=vmem, size = 0x12000, scoped, tag = 'internal scratch']
  %s0 = inlined_call_operand.hbm [shape: f32[8,16], index: 0, kind: input, shape index: {}]
  %s1 = inlined_call_operand.hbm [shape: f32[16,128], index: 1, kind: input, shape index: {}]
  %s2 = inlined_call_operand.vmem [shape: f32[1,128], index: 2, kind: input, shape index: {}]
  %s3 = inlined_call_operand.hbm [shape: f32[128,256], index: 3, kind: input, shape index: {}]
  %s4 = inlined_call_operand.vmem [shape: f32[1,256], index: 4, kind: input, shape index: {}]
  %s5 = inlined_call_operand.hbm [shape: f32[8,128], index: 5, kind: output, shape index: {0}]
  %s6 = inlined_call_operand.hbm [shape: f32[8,256], index: 6, kind: output, shape index: {1}]
  %7 = xla_tuple %s5, %s6
  %s8 = sld [smem:[#allocation0]]
  $region50: #{tpu_custom_call.1} parent=0
    _
  %s10 = ssub.s32 1, %s8
  %s11 = scalar_select 0, %s10, %s8
  $region1: #{tpu_custom_call.1} parent=0
    #allocation2 [shape = 'u8[4096]{0}', space=vmem, size = 0x1000, scoped, tag = 'input window, operand 0, single buffered']
    #allocation3 [shape = 's32[1]{0}', space=sflag, size = 0x4, scoped, tag = 'scoped memory for tpu_custom_call.1']
    #allocation4 [shape = 's32[1]{0}', space=sflag, size = 0x4, scoped, tag = 'scoped memory for tpu_custom_call.1']
    #allocation5 [shape = 'u8[8192]{0}', space=vmem, size = 0x2000, scoped, tag = 'input window, operand 1, single buffered']
    #allocation6 [shape = 's32[1]{0}', space=sflag, size = 0x4, scoped, tag = 'scoped memory for tpu_custom_call.1']
    #allocation7 [shape = 'u8[131072]{0}', space=vmem, size = 0x20000, scoped, tag = 'input window, operand 3, single buffered']
    #allocation8 [shape = 'u8[4096]{0}', space=vmem, size = 0x1000, scoped, tag = 'output window, operand 0, single buffered']
    #allocation9 [shape = 'u8[8192]{0}', space=vmem, size = 0x2000, scoped, tag = 'output window, operand 1, single buffered']
    #allocation10 [shape = 's32[1]{0}', space=sflag, size = 0x4, scoped, tag = 'scoped memory for tpu_custom_call.1']
    %12 = vsyncpa [#allocation3], 0
    %13 = vsyncpa [#allocation6], 0
    %14 = vsyncpa [#allocation4], 0
    %15 = vsyncpa [#allocation10], 0
    // Predicated region
    $region2: #{tpu_custom_call.1} parent=1 // pred_check
      _
    $region3: #{tpu_custom_call.1} parent=1 // pred_check_branch
      %17 = sbr.rel (0) target = $region5
    $region4: #{tpu_custom_call.1} parent=1 // pred_region
      %s19 = ssub.s32 128, 128
      %20 = vsyncadd [#allocation3], %s19
      %s22 = sshll.u32 [#allocation2], 4
      %s23 = int_to_ptr.vmem [resolvable:$true] %s22
      %25 = dma.hbm_to_vmem [thread:$0]  %s0, 128, %s23, [#allocation3]
    $region5: #{tpu_custom_call.1} parent=1 // pred_fallthru
      _
    // Predicated region
    $region6: #{tpu_custom_call.1} parent=1 // pred_check
      _
    $region7: #{tpu_custom_call.1} parent=1 // pred_check_branch
      %27 = sbr.rel (0) target = $region9
    $region8: #{tpu_custom_call.1} parent=1 // pred_region
      %s29 = ssub.s32 256, 256
      %30 = vsyncadd [#allocation6], %s29
      %s31 = sshll.u32 [#allocation5], 4
      %s32 = int_to_ptr.vmem [resolvable:$true] %s31
      %37 = dma.hbm_to_vmem [thread:$0]  %s1, 256, %s32, [#allocation6], 128, 128, 8
    $region9: #{tpu_custom_call.1} parent=1 // pred_fallthru
      _
    // Predicated region
    $region10: #{tpu_custom_call.1} parent=1 // pred_check
      _
    $region11: #{tpu_custom_call.1} parent=1 // pred_check_branch
      %39 = sbr.rel (0) target = $region13
    $region12: #{tpu_custom_call.1} parent=1 // pred_region
      _
    $region13: #{tpu_custom_call.1} parent=1 // pred_fallthru
      _
    // Predicated region
    $region14: #{tpu_custom_call.1} parent=1 // pred_check
      _
    $region15: #{tpu_custom_call.1} parent=1 // pred_check_branch
      %41 = sbr.rel (0) target = $region17
    $region16: #{tpu_custom_call.1} parent=1 // pred_region
      %s43 = ssub.s32 4096, 4096
      %44 = vsyncadd [#allocation6], %s43
      %s45 = sshll.u32 [#allocation7], 4
      %s46 = int_to_ptr.vmem [resolvable:$true] %s45
      %51 = dma.hbm_to_vmem [thread:$0]  %s3, 4096, %s46, [#allocation6], 256, 256, 16
    $region17: #{tpu_custom_call.1} parent=1 // pred_fallthru
      _
    // Predicated region
    $region18: #{tpu_custom_call.1} parent=1 // pred_check
      _
    $region19: #{tpu_custom_call.1} parent=1 // pred_check_branch
      %53 = sbr.rel (0) target = $region21
    $region20: #{tpu_custom_call.1} parent=1 // pred_region
      _
    $region21: #{tpu_custom_call.1} parent=1 // pred_fallthru
      _
    // Predicated region
    $region22: #{tpu_custom_call.1} parent=1 // pred_check
      _
    $region23: #{tpu_custom_call.1} parent=1 // pred_check_branch
      %55 = sbr.rel (0) target = $region25
    $region24: #{tpu_custom_call.1} parent=1 // pred_region
      %56 = dma.done [#allocation3], 128
    $region25: #{tpu_custom_call.1} parent=1 // pred_fallthru
      _
    // Predicated region
    $region26: #{tpu_custom_call.1} parent=1 // pred_check
      _
    $region27: #{tpu_custom_call.1} parent=1 // pred_check_branch
      %58 = sbr.rel (0) target = $region29
    $region28: #{tpu_custom_call.1} parent=1 // pred_region
      %59 = dma.done [#allocation6], 256
    $region29: #{tpu_custom_call.1} parent=1 // pred_fallthru
      _
    // Predicated region
    $region30: #{tpu_custom_call.1} parent=1 // pred_check
      _
    $region31: #{tpu_custom_call.1} parent=1 // pred_check_branch
      %61 = sbr.rel (0) target = $region33
    $region32: #{tpu_custom_call.1} parent=1 // pred_region
      %62 = dma.done [#allocation6], 4096
    $region33: #{tpu_custom_call.1} parent=1 // pred_fallthru
      _
    %v63 = vld [vmem:[#allocation2] sm:$0xff]
    %v64 = vld [vmem:[#allocation5] sm:$0xff]
    %v65 = vld [vmem:[#allocation5 + $0x8] sm:$0xff]
    %v66 = vld [vmem:[%s2] sm:$0x1]
    %v68 = vlaneseq
    %v69 = vshrl.u32 %v68, 7
    %v70 = vsub.s32 0, %v69
    %v71 = vrot.slane %v66, %v70
    %vm73 = vcmask 130048
    %v75 = vsel %vm73, %v63, 0
    %77 = vmatprep.subr.mxu0 0.0
    %78 = vmatpush1.msra.mxu0 %v64
    %79 = vmatprep.subr.mxu0 0.0
    %80 = vmatpush1.msra.mxu0 %v65
    %81 = vmatprep.subr.mxu0 0.0
    %82 = vmatpush1.msra.mxu0 0.0
    %83 = vmatprep.subr.mxu0 0.0
    %84 = vmatpush1.msra.mxu0 0.0
    %85 = vmatprep.subr.mxu0 0.0
    %86 = vmatpush1.msra.mxu0 0.0
    %87 = vmatprep.subr.mxu0 0.0
    %88 = vmatpush1.msra.mxu0 0.0
    %89 = vmatprep.subr.mxu0 0.0
    %90 = vmatpush1.msra.mxu0 0.0
    %91 = vmatprep.subr.mxu0 0.0
    %92 = vmatpush1.msra.mxu0 0.0
    %93 = vmatprep.subr.mxu0 0.0
    %94 = vmatpush1.msra.mxu0 0.0
    %95 = vmatprep.subr.mxu0 0.0
    %96 = vmatpush1.msra.mxu0 0.0
    %97 = vmatprep.subr.mxu0 0.0
    %98 = vmatpush1.msra.mxu0 0.0
    %99 = vmatprep.subr.mxu0 0.0
    %100 = vmatpush1.msra.mxu0 0.0
    %101 = vmatprep.subr.mxu0 0.0
    %102 = vmatpush1.msra.mxu0 0.0
    %103 = vmatprep.subr.mxu0 0.0
    %104 = vmatpush1.msra.mxu0 0.0
    %105 = vmatprep.subr.mxu0 0.0
    %106 = vmatpush1.msra.mxu0 0.0
    %107 = vmatprep.subr.mxu0 0.0
    %108 = vmatpush1.msra.mxu0 0.0
    %109 = vmatprep.subr.mxu0 0.0
    %110 = vmatpush1.msra.mxu0 0.0
    %111 = vmatprep.subr.mxu0 0.0
    %112 = vmatpush1.msra.mxu0 0.0
    %113 = vmatprep.subr.mxu0 0.0
    %114 = vmatpush1.msra.mxu0 0.0
    %115 = vmatprep.subr.mxu0 0.0
    %116 = vmatpush1.msra.mxu0 0.0
    %117 = vmatprep.subr.mxu0 0.0
    %118 = vmatpush1.msra.mxu0 0.0
    %119 = vmatprep.subr.mxu0 0.0
    %120 = vmatpush1.msra.mxu0 0.0
    %121 = vmatprep.subr.mxu0 0.0
    %122 = vmatpush1.msra.mxu0 0.0
    %123 = vmatprep.subr.mxu0 0.0
    %124 = vmatpush1.msra.mxu0 0.0
    %125 = vmatprep.subr.mxu0 0.0
    %126 = vmatpush1.msra.mxu0 0.0
    %127 = vmatprep.subr.mxu0 0.0
    %128 = vmatpush1.msra.mxu0 0.0
    %129 = vmatprep.subr.mxu0 0.0
    %130 = vmatpush1.msra.mxu0 0.0
    %131 = vmatprep.subr.mxu0 0.0
    %132 = vmatpush1.msra.mxu0 0.0
    %133 = vmatprep.subr.mxu0 0.0
    %134 = vmatpush1.msra.mxu0 0.0
    %135 = vmatprep.subr.mxu0 0.0
    %136 = vmatpush1.msra.mxu0 0.0
    %137 = vmatprep.subr.mxu0 0.0
    %138 = vmatpush1.msra.mxu0 0.0
    %139 = vmatprep.subr.mxu0 0.0
    %140 = vmatpush1.msra.mxu0 0.0
    %141 = vmatprep.mubr.f32.mxu0 0.0
    %142 = vmatmul.mubr.f32.gmra.mrb[0].mxu0 %v75
    %v143 = vpop.f32.mrb[0].mxu0
    %v144 = vadd.f32 %v71, %v143
    %v145 = vpop.f32.mrb[0].mxu0
    %146 = vdwg.mxu0
    %v147 = vand.u32 2147483647, %v144
    %vm148 = vcmp.le.f32.partialorder %v147, 0.7853982
    %vm149 = vcmp.lt.s32.totalorder %v144, 0
    %v150 = vand.u32 %v144, 2139095040
    %v151 = vshrl.u32 %v150, 23
    %v152 = vsub.s32 %v151, 127
    %v153 = vand.u32 2147483647, %v144
    %v154 = vand.u32 %v153, 8388607
    %v155 = vor.u32 %v154, 8388608
    %v156 = vsub.s32 0, %v155
    %v157 = vadd.s32 %v152, 1
    %vm158 = vcmp.gt.s32.totalorder %v157, 0
    %v159 = vsel %vm158, %v157, 0
    %v160 = vshrl.u32 %v159, 5
    %v161 = vand.u32 %v159, 31
    %v162 = vsub.s32 32, %v161
    %v163 = vshrl.u32 683565275, %v162
    %v164 = vshll.u32 683565275, %v161
    %v165 = vshrl.u32 2475754826, %v162
    %v166 = vor.u32 %v164, %v165
    %v167 = vshll.u32 2475754826, %v161
    %v168 = vshrl.u32 2131351028, %v162
    %v169 = vor.u32 %v167, %v168
    %v170 = vshll.u32 2131351028, %v161
    %v171 = vshrl.u32 2102212464, %v162
    %v172 = vor.u32 %v170, %v171
    %v173 = vshll.u32 2102212464, %v161
    %v174 = vshrl.u32 920167782, %v162
    %v175 = vor.u32 %v173, %v174
    %v176 = vshll.u32 920167782, %v161
    %v177 = vshrl.u32 1326507024, %v162
    %v178 = vor.u32 %v176, %v177
    %vm179 = vcmp.lt.s32.totalorder %v160, 1
    %vm180 = vcmp.lt.s32.totalorder %v160, 2
    %vm181 = vcmp.lt.s32.totalorder %v160, 3
    %vm182 = vcmp.lt.s32.totalorder %v160, 4
    %v183 = vsel %vm179, %v163, %v166
    %v184 = vsel %vm182, %v172, 2102212464
    %v185 = vsel %vm181, %v169, %v184
    %v186 = vsel %vm180, %v183, %v185
    %v187 = vsel %vm179, %v166, %v169
    %v188 = vsel %vm182, %v175, 920167782
    %v189 = vsel %vm181, %v172, %v188
    %v190 = vsel %vm180, %v187, %v189
    %v191 = vsel %vm179, %v169, %v172
    %v192 = vsel %vm182, %v178, 1326507024
    %v193 = vsel %vm181, %v175, %v192
    %v194 = vsel %vm180, %v191, %v193
    %v195 = vshll.u32 %v155, 8
    %v196 = vmul.u32.u64.compose %v195, %v194
    %v197 = vextract.low.u32 %v196
    %v198 = vextract.high.u32 %v196
    %v199 = vmul.u32.u64.compose %v195, %v190
    %v200 = vextract.low.u32 %v199
    %v201 = vextract.high.u32 %v199
    %v202 = vmul.u32 %v195, %v186
    %v203 = vadd.s32 %v198, %v200
    %vm204 = vc.u32 %v198, %v200
    %v205 = vadd.s32 %v201, 1
    %v206 = vsel %vm204, %v205, %v201
    %v207 = vadd.s32 %v202, %v206
    %v208 = vadd.s32 %v207, 536870912
    %v209 = vshrl.u32 %v208, 30
    %v210 = vshll.u32 %v209, 30
    %v211 = vsub.s32 %v207, %v210
    %vm212 = vcmp.lt.s32.totalorder %v211, 0
    %v213 = vsub.s32 0, %v211
    %v214 = vsel %vm212, %v213, %v211
    %v215 = vclz %v214
    %v216 = vsub.s32 %v215, 2
    %vm217 = vcmp.gt.s32.totalorder 0, %v216
    %v218 = vsel %vm217, 0, %v216
    %v219 = vsub.s32 32, %v218
    %v220 = vshll.u32 %v211, %v218
    %v221 = vshrl.u32 %v203, %v219
    %v222 = vor.u32 %v220, %v221
    %v223 = vsub.s32 4294967266, %v218
    %v224 = vadd.s32 %v223, 127
    %v225 = vshll.u32 %v224, 23
    %v226 = vor.u32 4788187, %v225
    %v227 = vand.u32 2147483647, %v226
    %v229 = vcvt.s32.f32 %v222
    %v230 = vmul.f32 %v229, %v227
    %v231 = vxor.u32 %v230, 2147483648
    %v232 = vsel %vm149, %v231, %v230
    %v233 = vsub.s32 4, %v209
    %v234 = vsel %vm149, %v233, %v209
    %v235 = vsel %vm148, %v144, %v232
    %v236 = vsel %vm148, 0, %v234
    %v237 = vcosq.f32.pop %v235
    %v238 = vsinq.f32.pop %v235
    %vm239 = vweird.f32 %v144
    %v240 = vand.u32 %v236, 3
    %vm241 = vcmp.lt.s32.totalorder %v240, 2
    %vm242 = vcmp.eq.s32.totalorder %v240, 0
    %v243 = vxor.u32 %v238, 2147483648
    %v244 = vsel %vm242, %v237, %v243
    %vm245 = vcmp.eq.s32.totalorder %v240, 2
    %v246 = vxor.u32 %v237, 2147483648
    %v247 = vsel %vm245, %v246, %v238
    %v248 = vsel %vm241, %v244, %v247
    %v249 = vsel %vm239, nan, %v248
    %v250 = vmul.f32 %v249, 0.125
    %251 = vst [vmem:[#allocation8] sm:$0xff] %v250
    %v252 = vld [vmem:[#allocation7] sm:$0xff]
    %v253 = vld [vmem:[#allocation7 + $0x8] sm:$0xff]
    %v254 = vld [vmem:[#allocation7 + $0x10] sm:$0xff]
    %v255 = vld [vmem:[#allocation7 + $0x18] sm:$0xff]
    %v256 = vld [vmem:[#allocation7 + $0x20] sm:$0xff]
    %v257 = vld [vmem:[#allocation7 + $0x28] sm:$0xff]
    %v258 = vld [vmem:[#allocation7 + $0x30] sm:$0xff]
    %v259 = vld [vmem:[#allocation7 + $0x38] sm:$0xff]
    %v260 = vld [vmem:[#allocation7 + $0x40] sm:$0xff]
    %v261 = vld [vmem:[#allocation7 + $0x48] sm:$0xff]
    %v262 = vld [vmem:[#allocation7 + $0x50] sm:$0xff]
    %v263 = vld [vmem:[#allocation7 + $0x58] sm:$0xff]
    %v264 = vld [vmem:[#allocation7 + $0x60] sm:$0xff]
    %v265 = vld [vmem:[#allocation7 + $0x68] sm:$0xff]
    %v266 = vld [vmem:[#allocation7 + $0x70] sm:$0xff]
    %v267 = vld [vmem:[#allocation7 + $0x78] sm:$0xff]
    %v268 = vld [vmem:[#allocation7 + $0x80] sm:$0xff]
    %v269 = vld [vmem:[#allocation7 + $0x88] sm:$0xff]
    %v270 = vld [vmem:[#allocation7 + $0x90] sm:$0xff]
    %v271 = vld [vmem:[#allocation7 + $0x98] sm:$0xff]
    %v272 = vld [vmem:[#allocation7 + $0xa0] sm:$0xff]
    %v273 = vld [vmem:[#allocation7 + $0xa8] sm:$0xff]
    %v274 = vld [vmem:[#allocation7 + $0xb0] sm:$0xff]
    %v275 = vld [vmem:[#allocation7 + $0xb8] sm:$0xff]
    %v276 = vld [vmem:[#allocation7 + $0xc0] sm:$0xff]
    %v277 = vld [vmem:[#allocation7 + $0xc8] sm:$0xff]
    %v278 = vld [vmem:[#allocation7 + $0xd0] sm:$0xff]
    %v279 = vld [vmem:[#allocation7 + $0xd8] sm:$0xff]
    %v280 = vld [vmem:[#allocation7 + $0xe0] sm:$0xff]
    %v281 = vld [vmem:[#allocation7 + $0xe8] sm:$0xff]
    %v282 = vld [vmem:[#allocation7 + $0xf0] sm:$0xff]
    %v283 = vld [vmem:[#allocation7 + $0xf8] sm:$0xff]
    %v284 = vld [vmem:[%s4] sm:$0x3]
    %v286 = vlaneseq
    %v287 = vshrl.u32 %v286, 7
    %v288 = vsub.s32 0, %v287
    %v289 = vrot.slane %v284, %v288
    %v290 = vlaneseq
    %v291 = vshrl.u32 %v290, 7
    %v292 = vsub.s32 1, %v291
    %v293 = vrot.slane %v284, %v292
    %296 = vmatprep.subr.mxu0 %v253
    %297 = vmatpush1.msra.mxu0 %v252
    %298 = vmatprep.subr.mxu0 %v255
    %299 = vmatpush1.msra.mxu0 %v254
    %300 = vmatprep.subr.mxu0 %v257
    %301 = vmatpush1.msra.mxu0 %v256
    %302 = vmatprep.subr.mxu0 %v259
    %303 = vmatpush1.msra.mxu0 %v258
    %304 = vmatprep.subr.mxu0 %v261
    %305 = vmatpush1.msra.mxu0 %v260
    %306 = vmatprep.subr.mxu0 %v263
    %307 = vmatpush1.msra.mxu0 %v262
    %308 = vmatprep.subr.mxu0 %v265
    %309 = vmatpush1.msra.mxu0 %v264
    %310 = vmatprep.subr.mxu0 %v267
    %311 = vmatpush1.msra.mxu0 %v266
    %312 = vmatprep.subr.mxu0 %v269
    %313 = vmatpush1.msra.mxu0 %v268
    %314 = vmatprep.subr.mxu0 %v271
    %315 = vmatpush1.msra.mxu0 %v270
    %316 = vmatprep.subr.mxu0 %v273
    %317 = vmatpush1.msra.mxu0 %v272
    %318 = vmatprep.subr.mxu0 %v275
    %319 = vmatpush1.msra.mxu0 %v274
    %320 = vmatprep.subr.mxu0 %v277
    %321 = vmatpush1.msra.mxu0 %v276
    %322 = vmatprep.subr.mxu0 %v279
    %323 = vmatpush1.msra.mxu0 %v278
    %324 = vmatprep.subr.mxu0 %v281
    %325 = vmatpush1.msra.mxu0 %v280
    %326 = vmatprep.subr.mxu0 %v283
    %327 = vmatpush1.msra.mxu0 %v282
    %328 = vmatprep.subr.mxu0 0.0
    %329 = vmatpush1.msra.mxu0 0.0
    %330 = vmatprep.subr.mxu0 0.0
    %331 = vmatpush1.msra.mxu0 0.0
    %332 = vmatprep.subr.mxu0 0.0
    %333 = vmatpush1.msra.mxu0 0.0
    %334 = vmatprep.subr.mxu0 0.0
    %335 = vmatpush1.msra.mxu0 0.0
    %336 = vmatprep.subr.mxu0 0.0
    %337 = vmatpush1.msra.mxu0 0.0
    %338 = vmatprep.subr.mxu0 0.0
    %339 = vmatpush1.msra.mxu0 0.0
    %340 = vmatprep.subr.mxu0 0.0
    %341 = vmatpush1.msra.mxu0 0.0
    %342 = vmatprep.subr.mxu0 0.0
    %343 = vmatpush1.msra.mxu0 0.0
    %344 = vmatprep.subr.mxu0 0.0
    %345 = vmatpush1.msra.mxu0 0.0
    %346 = vmatprep.subr.mxu0 0.0
    %347 = vmatpush1.msra.mxu0 0.0
    %348 = vmatprep.subr.mxu0 0.0
    %349 = vmatpush1.msra.mxu0 0.0
    %350 = vmatprep.subr.mxu0 0.0
    %351 = vmatpush1.msra.mxu0 0.0
    %352 = vmatprep.subr.mxu0 0.0
    %353 = vmatpush1.msra.mxu0 0.0
    %354 = vmatprep.subr.mxu0 0.0
    %355 = vmatpush1.msra.mxu0 0.0
    %356 = vmatprep.subr.mxu0 0.0
    %357 = vmatpush1.msra.mxu0 0.0
    %358 = vmatprep.subr.mxu0 0.0
    %359 = vmatpush1.msra.mxu0 0.0
    %360 = vmatprep.mubr.f32.mxu0 0.0
    %361 = vmatmul.mubr.f32.gmra.mrb[0].mxu0 %v250
    %v362 = vpop.f32.mrb[0].mxu0
    %v363 = vadd.f32 %v289, %v362
    %v364 = vpop.f32.mrb[0].mxu0
    %v365 = vadd.f32 %v293, %v364
    %366 = vdwg.mxu0
    %367 = vst [vmem:[#allocation9] sm:$0xff] %v363
    %368 = vst [vmem:[#allocation9 + $0x8] sm:$0xff] %v365
    // Predicated region
    $region34: #{tpu_custom_call.1} parent=1 // pred_check
      _
    $region35: #{tpu_custom_call.1} parent=1 // pred_check_branch
      %370 = sbr.rel (0) target = $region37
    $region36: #{tpu_custom_call.1} parent=1 // pred_region
      %s372 = ssub.s32 128, 128
      %373 = vsyncadd [#allocation4], %s372
      %s375 = sshll.u32 [#allocation8], 4
      %s376 = int_to_ptr.vmem [resolvable:$true] %s375
      %378 = dma.vmem_to_hbm [thread:$0]  %s376, 128, %s5, [#allocation4]
    $region37: #{tpu_custom_call.1} parent=1 // pred_fallthru
      _
    // Predicated region
    $region38: #{tpu_custom_call.1} parent=1 // pred_check
      _
    $region39: #{tpu_custom_call.1} parent=1 // pred_check_branch
      %380 = sbr.rel (0) target = $region41
    $region40: #{tpu_custom_call.1} parent=1 // pred_region
      %s382 = ssub.s32 256, 256
      %383 = vsyncadd [#allocation10], %s382
      %s385 = sshll.u32 [#allocation9], 4
      %s386 = int_to_ptr.vmem [resolvable:$true] %s385
      %388 = dma.vmem_to_hbm [thread:$0]  %s386, 256, %s6, [#allocation10]
    $region41: #{tpu_custom_call.1} parent=1 // pred_fallthru
      _
    // Predicated region
    $region42: #{tpu_custom_call.1} parent=1 // pred_check
      _
    $region43: #{tpu_custom_call.1} parent=1 // pred_check_branch
      %390 = sbr.rel (0) target = $region45
    $region44: #{tpu_custom_call.1} parent=1 // pred_region
      %391 = dma.done [#allocation4], 128
    $region45: #{tpu_custom_call.1} parent=1 // pred_fallthru
      _
    // Predicated region
    $region46: #{tpu_custom_call.1} parent=1 // pred_check
      _
    $region47: #{tpu_custom_call.1} parent=1 // pred_check_branch
      %393 = sbr.rel (0) target = $region49
    $region48: #{tpu_custom_call.1} parent=1 // pred_region
      %394 = dma.done [#allocation10], 256
    $region49: #{tpu_custom_call.1} parent=1 // pred_fallthru
      _
    %395 = vsyncpa [#allocation3], 1
    %396 = vsyncpa [#allocation6], 1
    %397 = vsyncpa [#allocation4], 1
    %398 = vsyncpa [#allocation10], 1

</llo_original>
